<compile_context>
chip_gen: v6e
topology: v6e:2x2x1
jax: 0.10.0
libtpu: 0.0.40
codegen_flags: <defaults>
</compile_context>

<pallas_src>
import jax
import jax.numpy as jnp
from jax.experimental import pallas as pl
from jax.experimental.pallas import tpu as pltpu


# ---------------------------------------------------------------------------
# Kernels
# ---------------------------------------------------------------------------

def project_kernel(x_ref, w_ref, o_ref):
    """XW = x @ W_cat  (fused estimator + GNN input projection)."""
    o_ref[...] = jnp.dot(
        x_ref[...], w_ref[...], preferred_element_type=jnp.float32
    ).astype(o_ref.dtype)


def aggregate_kernel(a_ref, xw_ref, b_ref, h_ref, acc_ref):
    """H = A_hat @ XW + b_cat, tiled over (row, k) with an f32 accumulator."""
    k = pl.program_id(1)

    @pl.when(k == 0)
    def _():
        acc_ref[...] = jnp.zeros_like(acc_ref)

    acc_ref[...] += jnp.dot(
        a_ref[...], xw_ref[...], preferred_element_type=jnp.float32
    )

    @pl.when(k == pl.num_programs(1) - 1)
    def _():
        h_ref[...] = (acc_ref[...] + b_ref[...]).astype(h_ref.dtype)


# ---------------------------------------------------------------------------
# Glue (plain JAX)
# ---------------------------------------------------------------------------

def normalized_adjacency(edge_index, num_nodes):
    """Dense A_hat = D^{-1/2} (A + I) D^{-1/2} from a [2, E] edge_index."""
    src, dst = edge_index[0], edge_index[1]
    a = jnp.zeros((num_nodes, num_nodes), jnp.float32)
    a = a.at[src, dst].set(1.0)
    a = a.at[dst, src].set(1.0)          # treat graph as undirected
    a = a + jnp.eye(num_nodes, dtype=jnp.float32)   # self-loops
    deg = jnp.sum(a, axis=1)
    dinv = jnp.where(deg > 0, 1.0 / jnp.sqrt(deg), 0.0)
    return a * dinv[:, None] * dinv[None, :]


def _pick_tile(n, target, align):
    """Largest t <= target with t % align == 0 and n % t == 0, else full n."""
    t = min(target, n)
    t = (t // align) * align
    while t >= align:
        if n % t == 0:
            return t
        t -= align
    return n


def fairgnn_forward(x, edge_index, params, *, compute_dtype=jnp.bfloat16,
                    tm=None, tk=None):
    n, f = x.shape
    h_est = params["w_est"].shape[1]
    nhid = params["w_gnn"].shape[1]
    h_cat = h_est + nhid

    a_hat = normalized_adjacency(edge_index, n).astype(compute_dtype)
    xc = x.astype(compute_dtype)

    # Fused GCNConv weights / biases:  [estimator branch | GNN branch].
    w_cat = jnp.concatenate([params["w_est"], params["w_gnn"]], axis=1)
    w_cat = w_cat.astype(compute_dtype)
    b_cat = jnp.concatenate([params["b_est"], params["b_gnn"]], axis=1)
    b_cat = b_cat.astype(jnp.float32)

    # Tile sizes: sublane-aligned rows, lane-aligned (128) contraction dim.
    if tm is None:
        tm = _pick_tile(n, 512, 16)
    if tk is None:
        tk = _pick_tile(n, 1024, 128)
    tmp = _pick_tile(n, 512, 16)

    cparams = pltpu.CompilerParams(
        dimension_semantics=("parallel",),
        vmem_limit_bytes=32 * 1024 * 1024)

    # --- kernel 1: XW = x @ W_cat (hoisted projection, done once) ----------
    xw = pl.pallas_call(
        project_kernel,
        grid=(n // tmp,),
        in_specs=[
            pl.BlockSpec((tmp, f), lambda i: (i, 0)),
            pl.BlockSpec((f, h_cat), lambda i: (0, 0)),
        ],
        out_specs=pl.BlockSpec((tmp, h_cat), lambda i: (i, 0)),
        out_shape=jax.ShapeDtypeStruct((n, h_cat), compute_dtype),
        compiler_params=cparams,
    )(xc, w_cat)

    # --- kernel 2: H = A_hat @ XW + b_cat (A streamed exactly once) --------
    bytes_per = jnp.dtype(compute_dtype).itemsize
    cost = pl.CostEstimate(
        flops=2 * n * n * h_cat,
        transcendentals=0,
        bytes_accessed=(n * n * bytes_per                        # A_hat
                        + (n // tm) * n * h_cat * bytes_per       # XW re-reads
                        + n * h_cat * 4),                         # H output
    )
    h = pl.pallas_call(
        aggregate_kernel,
        grid=(n // tm, n // tk),
        in_specs=[
            pl.BlockSpec((tm, tk), lambda i, k: (i, k)),      # A_hat tile
            pl.BlockSpec((tk, h_cat), lambda i, k: (k, 0)),   # XW k-slab
            pl.BlockSpec((1, h_cat), lambda i, k: (0, 0)),    # fused bias row
        ],
        out_specs=pl.BlockSpec((tm, h_cat), lambda i, k: (i, 0)),
        out_shape=jax.ShapeDtypeStruct((n, h_cat), jnp.float32),
        scratch_shapes=[pltpu.VMEM((tm, h_cat), jnp.float32)],
        compiler_params=pltpu.CompilerParams(
            dimension_semantics=("parallel", "arbitrary"),
            vmem_limit_bytes=32 * 1024 * 1024),
        cost_estimate=cost,
    )(a_hat, xw, b_cat)

    # --- lane-sparse Linear(., 1) heads kept in plain XLA (by design) ------
    h_e = h[:, :h_est]
    z = h[:, h_est:]
    s = h_e @ params["w_fc_est"].astype(jnp.float32) + params["b_fc_est"]
    y = z @ params["w_cls"].astype(jnp.float32) + params["b_cls"]
    return y, s, z


def reference_forward(x, edge_index, params):
    a_hat = normalized_adjacency(edge_index, x.shape[0])
    h_e = a_hat @ (x @ params["w_est"]) + params["b_est"]
    s = h_e @ params["w_fc_est"] + params["b_fc_est"]
    z = a_hat @ (x @ params["w_gnn"]) + params["b_gnn"]
    y = z @ params["w_cls"] + params["b_cls"]
    return y, s, z


if __name__ == "__main__":
    # FairGNN-consistent small shapes: N nodes, nfeat features,
    # args.hidden (estimator) = 16, args.num_hidden = 32.
    N, NFEAT, H_EST, NHID = 256, 32, 16, 32
    NUM_EDGES = 512

    key = jax.random.PRNGKey(0)
    kx, ke, k1, k2, k3, k4 = jax.random.split(key, 6)

    x = jax.random.normal(kx, (N, NFEAT), jnp.float32)
    edge_index = jax.random.randint(ke, (2, NUM_EDGES), 0, N, jnp.int32)

    # Deterministic synthetic parameters (weights stored as [in, out]).
    params = {
        "w_est":    0.1 * jax.random.normal(k1, (NFEAT, H_EST), jnp.float32),
        "b_est":    jnp.zeros((1, H_EST), jnp.float32),
        "w_fc_est": 0.1 * jax.random.normal(k2, (H_EST, 1), jnp.float32),
        "b_fc_est": jnp.zeros((1, 1), jnp.float32),
        "w_gnn":    0.1 * jax.random.normal(k3, (NFEAT, NHID), jnp.float32),
        "b_gnn":    jnp.zeros((1, NHID), jnp.float32),
        "w_cls":    0.1 * jax.random.normal(k4, (NHID, 1), jnp.float32),
        "b_cls":    jnp.zeros((1, 1), jnp.float32),
    }

    y_r, s_r, z_r = reference_forward(x, edge_index, params)

    # f32 path with small forced tiles so the (row, k) accumulator pipeline
    # (grid 2x2, pl.when init/epilogue) is actually exercised.
    y, s, z = jax.block_until_ready(
        fairgnn_forward(x, edge_index, params,
                        compute_dtype=jnp.float32, tm=128, tk=128))
    assert y.shape == (N, 1) and s.shape == (N, 1) and z.shape == (N, NHID)
    assert jnp.allclose(y, y_r, atol=1e-4, rtol=1e-4), "y mismatch (f32)"
    assert jnp.allclose(s, s_r, atol=1e-4, rtol=1e-4), "s mismatch (f32)"
    assert jnp.allclose(z, z_r, atol=1e-4, rtol=1e-4), "z mismatch (f32)"

    # Default bf16 path (production configuration: halves A_hat HBM traffic).
    yb, sb, zb = jax.block_until_ready(fairgnn_forward(x, edge_index, params))
    assert jnp.allclose(yb, y_r, atol=3e-2, rtol=3e-2), "y mismatch (bf16)"
    assert jnp.allclose(sb, s_r, atol=3e-2, rtol=3e-2), "s mismatch (bf16)"
    assert jnp.allclose(zb, z_r, atol=3e-2, rtol=3e-2), "z mismatch (bf16)"

    print("KERNEL_OK")
</pallas_src>

<mosaic_0001>
module attributes {stable_mosaic.version = 11 : i64} {
  func.func @project_kernel(%arg0: i32, %arg1: memref<256x32xf32, #tpu.memory_space<vmem>>, %arg2: memref<32x48xf32, #tpu.memory_space<vmem>>, %arg3: memref<256x48xf32, #tpu.memory_space<vmem>>) attributes {dimension_semantics = [#tpu.dimension_semantics<parallel>], iteration_bounds = array<i64: 1>, scalar_prefetch = 0 : i64, scratch_operands = 0 : i64, tpu.core_type = #tpu.core_type<tc>, window_params = [{transform_indices = @transform_0, window_bounds = array<i64: 256, 32>}, {pipeline_mode = #tpu.pipeline_mode<synchronous>, transform_indices = @transform_1, window_bounds = array<i64: 32, 48>}, {transform_indices = @transform_2, window_bounds = array<i64: 256, 48>}]} {
    %c0 = arith.constant 0 : index
    %c0_0 = arith.constant 0 : index
    %0 = vector.load %arg1[%c0, %c0_0] : memref<256x32xf32, #tpu.memory_space<vmem>>, vector<256x32xf32>
    %c0_1 = arith.constant 0 : index
    %c0_2 = arith.constant 0 : index
    %1 = vector.load %arg2[%c0_1, %c0_2] : memref<32x48xf32, #tpu.memory_space<vmem>>, vector<32x48xf32>
    %cst = arith.constant dense<0.000000e+00> : vector<256x48xf32>
    %2 = tpu.matmul %0, %1, %cst {dimension_numbers = #tpu.dot_dimension_numbers<[1], [0], [0], [1], [0, 0, 1, 1], [], []>} : vector<256x32xf32>, vector<32x48xf32>, vector<256x48xf32> -> vector<256x48xf32>
    %c0_3 = arith.constant 0 : index
    %c0_4 = arith.constant 0 : index
    %3 = vector.load %arg3[%c0_3, %c0_4] : memref<256x48xf32, #tpu.memory_space<vmem>>, vector<256x48xf32>
    tpu.vector_store %arg3[%c0_3, %c0_4], %2 {strides = array<i32>} : memref<256x48xf32, #tpu.memory_space<vmem>>, vector<256x48xf32>,
    return
  }
  func.func @transform_0(%arg0: i32) -> (i32, i32) {
    %c0_i32 = arith.constant 0 : i32
    %c0_i32_0 = arith.constant 0 : i32
    return %arg0, %c0_i32 : i32, i32
  }
  func.func @transform_1(%arg0: i32) -> (i32, i32) {
    %c0_i32 = arith.constant 0 : i32
    %c0_i32_0 = arith.constant 0 : i32
    %c0_i32_1 = arith.constant 0 : i32
    return %c0_i32, %c0_i32_0 : i32, i32
  }
  func.func @transform_2(%arg0: i32) -> (i32, i32) {
    %c0_i32 = arith.constant 0 : i32
    %c0_i32_0 = arith.constant 0 : i32
    return %arg0, %c0_i32 : i32, i32
  }
}

</mosaic_0001>

<llo_original>
// kernel: tpu_custom_call.1
$region0: #{tpu_custom_call.1}
  #allocation0 [shape = 'u32[]', space=smem, size = 0x4, offset = 0x4, fixed_abs, tag = 'smem constant byte address 0x4 - core index']
  #allocation1 [shape = 'u32[144,128]{1,0:T(1,128)}', space=vmem, size = 0x12000, scoped, tag = 'internal scratch']
  %s0 = inlined_call_operand.vmem [shape: f32[256,32], index: 0, kind: input, shape index: {}]
  %s1 = inlined_call_operand.vmem [shape: f32[32,48], index: 1, kind: input, shape index: {}]
  %s2 = inlined_call_operand.vmem [shape: f32[256,48], index: 2, kind: output, shape index: {}]
  %s3 = sld [smem:[#allocation0]]
  $region18: #{tpu_custom_call.1} parent=0
    _
  %s5 = ssub.s32 1, %s3
  %s6 = scalar_select 0, %s5, %s3
  // Predicated region
  $region2: #{tpu_custom_call.1} parent=0 // pred_check
    _
  $region3: #{tpu_custom_call.1} parent=0 // pred_check_branch
    %8 = sbr.rel (0) target = $region5
  $region4: #{tpu_custom_call.1} parent=0 // pred_region
    _
  $region5: #{tpu_custom_call.1} parent=0 // pred_fallthru
    _
  // Predicated region
  $region6: #{tpu_custom_call.1} parent=0 // pred_check
    _
  $region7: #{tpu_custom_call.1} parent=0 // pred_check_branch
    %10 = sbr.rel (0) target = $region9
  $region8: #{tpu_custom_call.1} parent=0 // pred_region
    _
  $region9: #{tpu_custom_call.1} parent=0 // pred_fallthru
    _
  %v11 = vld [vmem:[%s0] sm:$0xff]
  %v12 = vld [vmem:[%s0 + $0x8] sm:$0xff]
  %v13 = vld [vmem:[%s0 + $0x10] sm:$0xff]
  %v14 = vld [vmem:[%s0 + $0x18] sm:$0xff]
  %v15 = vld [vmem:[%s0 + $0x20] sm:$0xff]
  %v16 = vld [vmem:[%s0 + $0x28] sm:$0xff]
  %v17 = vld [vmem:[%s0 + $0x30] sm:$0xff]
  %v18 = vld [vmem:[%s0 + $0x38] sm:$0xff]
  %v19 = vld [vmem:[%s0 + $0x40] sm:$0xff]
  %v20 = vld [vmem:[%s0 + $0x48] sm:$0xff]
  %v21 = vld [vmem:[%s0 + $0x50] sm:$0xff]
  %v22 = vld [vmem:[%s0 + $0x58] sm:$0xff]
  %v23 = vld [vmem:[%s0 + $0x60] sm:$0xff]
  %v24 = vld [vmem:[%s0 + $0x68] sm:$0xff]
  %v25 = vld [vmem:[%s0 + $0x70] sm:$0xff]
  %v26 = vld [vmem:[%s0 + $0x78] sm:$0xff]
  %v27 = vld [vmem:[%s0 + $0x80] sm:$0xff]
  %v28 = vld [vmem:[%s0 + $0x88] sm:$0xff]
  %v29 = vld [vmem:[%s0 + $0x90] sm:$0xff]
  %v30 = vld [vmem:[%s0 + $0x98] sm:$0xff]
  %v31 = vld [vmem:[%s0 + $0xa0] sm:$0xff]
  %v32 = vld [vmem:[%s0 + $0xa8] sm:$0xff]
  %v33 = vld [vmem:[%s0 + $0xb0] sm:$0xff]
  %v34 = vld [vmem:[%s0 + $0xb8] sm:$0xff]
  %v35 = vld [vmem:[%s0 + $0xc0] sm:$0xff]
  %v36 = vld [vmem:[%s0 + $0xc8] sm:$0xff]
  %v37 = vld [vmem:[%s0 + $0xd0] sm:$0xff]
  %v38 = vld [vmem:[%s0 + $0xd8] sm:$0xff]
  %v39 = vld [vmem:[%s0 + $0xe0] sm:$0xff]
  %v40 = vld [vmem:[%s0 + $0xe8] sm:$0xff]
  %v41 = vld [vmem:[%s0 + $0xf0] sm:$0xff]
  %v42 = vld [vmem:[%s0 + $0xf8] sm:$0xff]
  %v43 = vld [vmem:[%s1] sm:$0xff]
  %v44 = vld [vmem:[%s1 + $0x8] sm:$0xff]
  %v45 = vld [vmem:[%s1 + $0x10] sm:$0xff]
  %v46 = vld [vmem:[%s1 + $0x18] sm:$0xff]
  %vm47 = vcmask 261120
  %v49 = vsel %vm47, %v11, 0
  %v52 = vsel %vm47, %v12, 0
  %v55 = vsel %vm47, %v13, 0
  %v58 = vsel %vm47, %v14, 0
  %v61 = vsel %vm47, %v15, 0
  %v64 = vsel %vm47, %v16, 0
  %v67 = vsel %vm47, %v17, 0
  %v70 = vsel %vm47, %v18, 0
  %v73 = vsel %vm47, %v19, 0
  %v76 = vsel %vm47, %v20, 0
  %v79 = vsel %vm47, %v21, 0
  %v82 = vsel %vm47, %v22, 0
  %v85 = vsel %vm47, %v23, 0
  %v88 = vsel %vm47, %v24, 0
  %v91 = vsel %vm47, %v25, 0
  %v94 = vsel %vm47, %v26, 0
  %v97 = vsel %vm47, %v27, 0
  %v100 = vsel %vm47, %v28, 0
  %v103 = vsel %vm47, %v29, 0
  %v106 = vsel %vm47, %v30, 0
  %v109 = vsel %vm47, %v31, 0
  %v112 = vsel %vm47, %v32, 0
  %v115 = vsel %vm47, %v33, 0
  %v118 = vsel %vm47, %v34, 0
  %v121 = vsel %vm47, %v35, 0
  %v124 = vsel %vm47, %v36, 0
  %v127 = vsel %vm47, %v37, 0
  %v130 = vsel %vm47, %v38, 0
  %v133 = vsel %vm47, %v39, 0
  %v136 = vsel %vm47, %v40, 0
  %v139 = vsel %vm47, %v41, 0
  %v142 = vsel %vm47, %v42, 0
  %144 = vmatprep.subr.mxu0 0.0
  %145 = vmatpush1.msra.mxu0 0.0
  %146 = vmatprep.subr.mxu0 0.0
  %147 = vmatpush1.msra.mxu0 0.0
  %148 = vmatprep.subr.mxu0 0.0
  %149 = vmatpush1.msra.mxu0 0.0
  %150 = vmatprep.subr.mxu0 0.0
  %151 = vmatpush1.msra.mxu0 0.0
  %152 = vmatprep.subr.mxu0 0.0
  %153 = vmatpush1.msra.mxu0 0.0
  %154 = vmatprep.subr.mxu0 0.0
  %155 = vmatpush1.msra.mxu0 0.0
  %156 = vmatprep.subr.mxu0 0.0
  %157 = vmatpush1.msra.mxu0 0.0
  %158 = vmatprep.subr.mxu0 0.0
  %159 = vmatpush1.msra.mxu0 0.0
  %160 = vmatprep.subr.mxu0 0.0
  %161 = vmatpush1.msra.mxu0 0.0
  %162 = vmatprep.subr.mxu0 0.0
  %163 = vmatpush1.msra.mxu0 0.0
  %164 = vmatprep.subr.mxu0 0.0
  %165 = vmatpush1.msra.mxu0 0.0
  %166 = vmatprep.subr.mxu0 0.0
  %167 = vmatpush1.msra.mxu0 0.0
  %168 = vmatprep.subr.mxu0 0.0
  %169 = vmatpush1.msra.mxu0 %v46
  %170 = vmatprep.subr.mxu0 0.0
  %171 = vmatpush1.msra.mxu0 %v45
  %172 = vmatprep.subr.mxu0 0.0
  %173 = vmatpush1.msra.mxu0 %v44
  %174 = vmatprep.subr.mxu0 0.0
  %175 = vmatpush1.msra.mxu0 %v43
  %176 = vmatprep.subr.mxu0 0.0
  %177 = vmatpush2.msra.mxu0 0.0
  %178 = vmatprep.subr.mxu0 0.0
  %179 = vmatpush2.msra.mxu0 0.0
  %180 = vmatprep.subr.mxu0 0.0
  %181 = vmatpush2.msra.mxu0 0.0
  %182 = vmatprep.subr.mxu0 0.0
  %183 = vmatpush2.msra.mxu0 0.0
  %184 = vmatprep.subr.mxu0 0.0
  %185 = vmatpush2.msra.mxu0 0.0
  %186 = vmatprep.subr.mxu0 0.0
  %187 = vmatpush2.msra.mxu0 0.0
  %188 = vmatprep.subr.mxu0 0.0
  %189 = vmatpush2.msra.mxu0 0.0
  %190 = vmatprep.subr.mxu0 0.0
  %191 = vmatpush2.msra.mxu0 0.0
  %192 = vmatprep.subr.mxu0 0.0
  %193 = vmatpush2.msra.mxu0 0.0
  %194 = vmatprep.subr.mxu0 0.0
  %195 = vmatpush2.msra.mxu0 0.0
  %196 = vmatprep.subr.mxu0 0.0
  %197 = vmatpush2.msra.mxu0 0.0
  %198 = vmatprep.subr.mxu0 0.0
  %199 = vmatpush2.msra.mxu0 0.0
  %200 = vmatprep.subr.mxu0 0.0
  %201 = vmatpush2.msra.mxu0 0.0
  %202 = vmatprep.subr.mxu0 0.0
  %203 = vmatpush2.msra.mxu0 0.0
  %204 = vmatprep.subr.mxu0 0.0
  %205 = vmatpush2.msra.mxu0 0.0
  %206 = vmatprep.subr.mxu0 0.0
  %207 = vmatpush2.msra.mxu0 0.0
  %208 = vmatprep.mubr.f32.mxu0 0.0
  %209 = vmatmul.mubr.f32.gmra.mxu0 %v49
  %v210 = vpop.f32.mrf.mxu0
  %v211 = vadd.f32 0.0, %v210
  %v212 = vpop.f32.mrf.mxu0
  %213 = vmatprep.mubr.f32.mxu0 0.0
  %214 = vmatmul.mubr.f32.gmra.mxu0 %v52
  %v215 = vpop.f32.mrf.mxu0
  %v216 = vadd.f32 0.0, %v215
  %v217 = vpop.f32.mrf.mxu0
  %218 = vmatprep.mubr.f32.mxu0 0.0
  %219 = vmatmul.mubr.f32.gmra.mxu0 %v55
  %v220 = vpop.f32.mrf.mxu0
  %v221 = vadd.f32 0.0, %v220
  %v222 = vpop.f32.mrf.mxu0
  %223 = vmatprep.mubr.f32.mxu0 0.0
  %224 = vmatmul.mubr.f32.gmra.mxu0 %v58
  %v225 = vpop.f32.mrf.mxu0
  %v226 = vadd.f32 0.0, %v225
  %v227 = vpop.f32.mrf.mxu0
  %228 = vmatprep.mubr.f32.mxu0 0.0
  %229 = vmatmul.mubr.f32.gmra.mxu0 %v61
  %v230 = vpop.f32.mrf.mxu0
  %v231 = vadd.f32 0.0, %v230
  %v232 = vpop.f32.mrf.mxu0
  %233 = vmatprep.mubr.f32.mxu0 0.0
  %234 = vmatmul.mubr.f32.gmra.mxu0 %v64
  %v235 = vpop.f32.mrf.mxu0
  %v236 = vadd.f32 0.0, %v235
  %v237 = vpop.f32.mrf.mxu0
  %238 = vmatprep.mubr.f32.mxu0 0.0
  %239 = vmatmul.mubr.f32.gmra.mxu0 %v67
  %v240 = vpop.f32.mrf.mxu0
  %v241 = vadd.f32 0.0, %v240
  %v242 = vpop.f32.mrf.mxu0
  %243 = vmatprep.mubr.f32.mxu0 0.0
  %244 = vmatmul.mubr.f32.gmra.mxu0 %v70
  %v245 = vpop.f32.mrf.mxu0
  %v246 = vadd.f32 0.0, %v245
  %v247 = vpop.f32.mrf.mxu0
  %248 = vmatprep.mubr.f32.mxu0 0.0
  %249 = vmatmul.mubr.f32.gmra.mxu0 %v73
  %v250 = vpop.f32.mrf.mxu0
  %v251 = vadd.f32 0.0, %v250
  %v252 = vpop.f32.mrf.mxu0
  %253 = vmatprep.mubr.f32.mxu0 0.0
  %254 = vmatmul.mubr.f32.gmra.mxu0 %v76
  %v255 = vpop.f32.mrf.mxu0
  %v256 = vadd.f32 0.0, %v255
  %v257 = vpop.f32.mrf.mxu0
  %258 = vmatprep.mubr.f32.mxu0 0.0
  %259 = vmatmul.mubr.f32.gmra.mxu0 %v79
  %v260 = vpop.f32.mrf.mxu0
  %v261 = vadd.f32 0.0, %v260
  %v262 = vpop.f32.mrf.mxu0
  %263 = vmatprep.mubr.f32.mxu0 0.0
  %264 = vmatmul.mubr.f32.gmra.mxu0 %v82
  %v265 = vpop.f32.mrf.mxu0
  %v266 = vadd.f32 0.0, %v265
  %v267 = vpop.f32.mrf.mxu0
  %268 = vmatprep.mubr.f32.mxu0 0.0
  %269 = vmatmul.mubr.f32.gmra.mxu0 %v85
  %v270 = vpop.f32.mrf.mxu0
  %v271 = vadd.f32 0.0, %v270
  %v272 = vpop.f32.mrf.mxu0
  %273 = vmatprep.mubr.f32.mxu0 0.0
  %274 = vmatmul.mubr.f32.gmra.mxu0 %v88
  %v275 = vpop.f32.mrf.mxu0
  %v276 = vadd.f32 0.0, %v275
  %v277 = vpop.f32.mrf.mxu0
  %278 = vmatprep.mubr.f32.mxu0 0.0
  %279 = vmatmul.mubr.f32.gmra.mxu0 %v91
  %v280 = vpop.f32.mrf.mxu0
  %v281 = vadd.f32 0.0, %v280
  %v282 = vpop.f32.mrf.mxu0
  %283 = vmatprep.mubr.f32.mxu0 0.0
  %284 = vmatmul.mubr.f32.gmra.mxu0 %v94
  %v285 = vpop.f32.mrf.mxu0
  %v286 = vadd.f32 0.0, %v285
  %v287 = vpop.f32.mrf.mxu0
  %288 = vmatprep.mubr.f32.mxu0 0.0
  %289 = vmatmul.mubr.f32.gmra.mxu0 %v97
  %v290 = vpop.f32.mrf.mxu0
  %v291 = vadd.f32 0.0, %v290
  %v292 = vpop.f32.mrf.mxu0
  %293 = vmatprep.mubr.f32.mxu0 0.0
  %294 = vmatmul.mubr.f32.gmra.mxu0 %v100
  %v295 = vpop.f32.mrf.mxu0
  %v296 = vadd.f32 0.0, %v295
  %v297 = vpop.f32.mrf.mxu0
  %298 = vmatprep.mubr.f32.mxu0 0.0
  %299 = vmatmul.mubr.f32.gmra.mxu0 %v103
  %v300 = vpop.f32.mrf.mxu0
  %v301 = vadd.f32 0.0, %v300
  %v302 = vpop.f32.mrf.mxu0
  %303 = vmatprep.mubr.f32.mxu0 0.0
  %304 = vmatmul.mubr.f32.gmra.mxu0 %v106
  %v305 = vpop.f32.mrf.mxu0
  %v306 = vadd.f32 0.0, %v305
  %v307 = vpop.f32.mrf.mxu0
  %308 = vmatprep.mubr.f32.mxu0 0.0
  %309 = vmatmul.mubr.f32.gmra.mxu0 %v109
  %v310 = vpop.f32.mrf.mxu0
  %v311 = vadd.f32 0.0, %v310
  %v312 = vpop.f32.mrf.mxu0
  %313 = vmatprep.mubr.f32.mxu0 0.0
  %314 = vmatmul.mubr.f32.gmra.mxu0 %v112
  %v315 = vpop.f32.mrf.mxu0
  %v316 = vadd.f32 0.0, %v315
  %v317 = vpop.f32.mrf.mxu0
  %318 = vmatprep.mubr.f32.mxu0 0.0
  %319 = vmatmul.mubr.f32.gmra.mxu0 %v115
  %v320 = vpop.f32.mrf.mxu0
  %v321 = vadd.f32 0.0, %v320
  %v322 = vpop.f32.mrf.mxu0
  %323 = vmatprep.mubr.f32.mxu0 0.0
  %324 = vmatmul.mubr.f32.gmra.mxu0 %v118
  %v325 = vpop.f32.mrf.mxu0
  %v326 = vadd.f32 0.0, %v325
  %v327 = vpop.f32.mrf.mxu0
  %328 = vmatprep.mubr.f32.mxu0 0.0
  %329 = vmatmul.mubr.f32.gmra.mxu0 %v121
  %v330 = vpop.f32.mrf.mxu0
  %v331 = vadd.f32 0.0, %v330
  %v332 = vpop.f32.mrf.mxu0
  %333 = vmatprep.mubr.f32.mxu0 0.0
  %334 = vmatmul.mubr.f32.gmra.mxu0 %v124
  %v335 = vpop.f32.mrf.mxu0
  %v336 = vadd.f32 0.0, %v335
  %v337 = vpop.f32.mrf.mxu0
  %338 = vmatprep.mubr.f32.mxu0 0.0
  %339 = vmatmul.mubr.f32.gmra.mxu0 %v127
  %v340 = vpop.f32.mrf.mxu0
  %v341 = vadd.f32 0.0, %v340
  %v342 = vpop.f32.mrf.mxu0
  %343 = vmatprep.mubr.f32.mxu0 0.0
  %344 = vmatmul.mubr.f32.gmra.mxu0 %v130
  %v345 = vpop.f32.mrf.mxu0
  %v346 = vadd.f32 0.0, %v345
  %v347 = vpop.f32.mrf.mxu0
  %348 = vmatprep.mubr.f32.mxu0 0.0
  %349 = vmatmul.mubr.f32.gmra.mxu0 %v133
  %v350 = vpop.f32.mrf.mxu0
  %v351 = vadd.f32 0.0, %v350
  %v352 = vpop.f32.mrf.mxu0
  %353 = vmatprep.mubr.f32.mxu0 0.0
  %354 = vmatmul.mubr.f32.gmra.mxu0 %v136
  %v355 = vpop.f32.mrf.mxu0
  %v356 = vadd.f32 0.0, %v355
  %v357 = vpop.f32.mrf.mxu0
  %358 = vmatprep.mubr.f32.mxu0 0.0
  %359 = vmatmul.mubr.f32.gmra.mxu0 %v139
  %v360 = vpop.f32.mrf.mxu0
  %v361 = vadd.f32 0.0, %v360
  %v362 = vpop.f32.mrf.mxu0
  %363 = vmatprep.mubr.f32.mxu0 0.0
  %364 = vmatmul.mubr.f32.gmra.mxu0 %v142
  %v365 = vpop.f32.mrf.mxu0
  %v366 = vadd.f32 0.0, %v365
  %v367 = vpop.f32.mrf.mxu0
  %368 = vdwg.mxu0
  %vm369 = vcmask 392192
  %370 = vst.msk [vmem:[%s2] sm:$0xff] %vm369, %v211
  %371 = vst.msk [vmem:[%s2 + $0x8] sm:$0xff] %vm369, %v216
  %372 = vst.msk [vmem:[%s2 + $0x10] sm:$0xff] %vm369, %v221
  %373 = vst.msk [vmem:[%s2 + $0x18] sm:$0xff] %vm369, %v226
  %374 = vst.msk [vmem:[%s2 + $0x20] sm:$0xff] %vm369, %v231
  %375 = vst.msk [vmem:[%s2 + $0x28] sm:$0xff] %vm369, %v236
  %376 = vst.msk [vmem:[%s2 + $0x30] sm:$0xff] %vm369, %v241
  %377 = vst.msk [vmem:[%s2 + $0x38] sm:$0xff] %vm369, %v246
  %378 = vst.msk [vmem:[%s2 + $0x40] sm:$0xff] %vm369, %v251
  %379 = vst.msk [vmem:[%s2 + $0x48] sm:$0xff] %vm369, %v256
  %380 = vst.msk [vmem:[%s2 + $0x50] sm:$0xff] %vm369, %v261
  %381 = vst.msk [vmem:[%s2 + $0x58] sm:$0xff] %vm369, %v266
  %382 = vst.msk [vmem:[%s2 + $0x60] sm:$0xff] %vm369, %v271
  %383 = vst.msk [vmem:[%s2 + $0x68] sm:$0xff] %vm369, %v276
  %384 = vst.msk [vmem:[%s2 + $0x70] sm:$0xff] %vm369, %v281
  %385 = vst.msk [vmem:[%s2 + $0x78] sm:$0xff] %vm369, %v286
  %386 = vst.msk [vmem:[%s2 + $0x80] sm:$0xff] %vm369, %v291
  %387 = vst.msk [vmem:[%s2 + $0x88] sm:$0xff] %vm369, %v296
  %388 = vst.msk [vmem:[%s2 + $0x90] sm:$0xff] %vm369, %v301
  %389 = vst.msk [vmem:[%s2 + $0x98] sm:$0xff] %vm369, %v306
  %390 = vst.msk [vmem:[%s2 + $0xa0] sm:$0xff] %vm369, %v311
  %391 = vst.msk [vmem:[%s2 + $0xa8] sm:$0xff] %vm369, %v316
  %392 = vst.msk [vmem:[%s2 + $0xb0] sm:$0xff] %vm369, %v321
  %393 = vst.msk [vmem:[%s2 + $0xb8] sm:$0xff] %vm369, %v326
  %394 = vst.msk [vmem:[%s2 + $0xc0] sm:$0xff] %vm369, %v331
  %395 = vst.msk [vmem:[%s2 + $0xc8] sm:$0xff] %vm369, %v336
  %396 = vst.msk [vmem:[%s2 + $0xd0] sm:$0xff] %vm369, %v341
  %397 = vst.msk [vmem:[%s2 + $0xd8] sm:$0xff] %vm369, %v346
  %398 = vst.msk [vmem:[%s2 + $0xe0] sm:$0xff] %vm369, %v351
  %399 = vst.msk [vmem:[%s2 + $0xe8] sm:$0xff] %vm369, %v356
  %400 = vst.msk [vmem:[%s2 + $0xf0] sm:$0xff] %vm369, %v361
  %401 = vst.msk [vmem:[%s2 + $0xf8] sm:$0xff] %vm369, %v366
  // Predicated region
  $region10: #{tpu_custom_call.1} parent=0 // pred_check
    _
  $region11: #{tpu_custom_call.1} parent=0 // pred_check_branch
    %403 = sbr.rel (0) target = $region13
  $region12: #{tpu_custom_call.1} parent=0 // pred_region
    _
  $region13: #{tpu_custom_call.1} parent=0 // pred_fallthru
    _
  // Predicated region
  $region14: #{tpu_custom_call.1} parent=0 // pred_check
    _
  $region15: #{tpu_custom_call.1} parent=0 // pred_check_branch
    %405 = sbr.rel (0) target = $region17
  $region16: #{tpu_custom_call.1} parent=0 // pred_region
    _
  $region17: #{tpu_custom_call.1} parent=0 // pred_fallthru
    _

</llo_original>
